<compile_context>
chip_gen: v7x
topology: tpu7x:2x2x1
jax: 0.10.0
libtpu: 0.0.40
codegen_flags: <defaults>
</compile_context>

<pallas_src>
import math

import jax
import jax.numpy as jnp
from jax.experimental import pallas as pl
from jax.experimental.pallas import tpu as pltpu


# ---------------- kernel ----------------

def _add_kernel(x_ref, b_ref, o_ref):
    # One vld + one vadd + one vst per vreg; the (1, tl) bias broadcasts over rows.
    o_ref[...] = x_ref[...] + b_ref[...]


# ---------------- per-generation tuning ----------------

def _device_config():
    """(x_block_target_bytes, vmem_limit_bytes) derived from the local TPU."""
    try:
        vmem_cap = int(pltpu.get_tpu_info().vmem_capacity_bytes)
    except Exception:  # unknown device / interpret mode: conservative defaults
        return 1 << 20, None
    if vmem_cap <= (64 << 20):
        # v7x-class: 64 MiB VMEM, ~3.2 TB/s HBM -> larger blocks amortize the
        # ~0.35 us per-step pipeline overhead; 2 in + 2 out buffers of 6 MiB
        # (+ resident bias) stay well under an explicit 40 MiB scoped limit.
        return 6 << 20, 40 << 20
    # v5e / v6e: 128 MiB physical VMEM; ~2 MiB tiles already ~85% of roofline.
    return 2 << 20, 32 << 20


# ---------------- block-size selection ----------------

def _round_up(x, m):
    return (x + m - 1) // m * m


def _pick_tiles(rows, lanes, dtype, target_bytes):
    """Pick (row_block, lane_block) whose *lane-padded* VMEM footprint is about
    target_bytes, respecting the dtype-dependent minimum tile."""
    itemsize = jnp.dtype(dtype).itemsize
    granule = max(8, 32 // itemsize)          # sublanes: f32 -> 8, bf16 -> 16, int8/fp8 -> 32

    # Lane block: full minor dim if narrow/cheap enough, else a multiple of 128.
    if lanes <= 128 or lanes * granule * itemsize <= target_bytes:
        tl = lanes
    else:
        budget = max(128, (target_bytes // (granule * itemsize)) // 128 * 128)
        tl = min((lanes // 128) * 128, budget)
    tl_pad = max(128, _round_up(tl, 128))     # VMEM rows always pad to 128 lanes

    # Row block: budget against the padded lane width, rounded to the granule.
    tr = max(granule, (target_bytes // (tl_pad * itemsize)) // granule * granule)
    if tr >= rows:
        tr = rows                             # full second-minor dim is always legal

    # Keep >= 2 blocks on a parallel axis when possible so v7x's two
    # TensorCores both get work (near-free on single-core v5e/v6e).
    if pl.cdiv(rows, tr) == 1 and pl.cdiv(lanes, tl) == 1:
        if rows >= 2 * granule:
            tr = _round_up(rows // 2, granule)
        elif lanes >= 256:
            tl = max(128, ((lanes // 2) // 128) * 128)
    return tr, tl


# ---------------- tiled launcher ----------------

def _launch(x2, pattern):
    """out[r, l] = x2[r, l] + pattern[l]  (bias row broadcast over rows)."""
    rows, lanes = x2.shape
    target_bytes, vmem_limit = _device_config()
    tr, tl = _pick_tiles(rows, lanes, x2.dtype, target_bytes)
    grid = (pl.cdiv(rows, tr), pl.cdiv(lanes, tl))
    return pl.pallas_call(
        _add_kernel,
        out_shape=jax.ShapeDtypeStruct((rows, lanes), x2.dtype),
        grid_spec=pltpu.PrefetchScalarGridSpec(
            num_scalar_prefetch=0,
            grid=grid,
            in_specs=[
                pl.BlockSpec((tr, tl), lambda i, j: (i, j)),
                pl.BlockSpec((1, tl), lambda i, j: (0, j)),   # tiny lane-bias tile
            ],
            out_specs=pl.BlockSpec((tr, tl), lambda i, j: (i, j)),
        ),
        compiler_params=pltpu.CompilerParams(
            dimension_semantics=("parallel", "parallel"),
            vmem_limit_bytes=vmem_limit),
    )(x2, pattern.reshape(1, lanes))


def _lane_bias_add(x2, pattern):
    """x2: (rows, P); pattern: (P,).  Lane-dense repack for narrow P when free."""
    rows, P = x2.shape
    if P < 128 and rows > 0:
        rep = math.lcm(P, 128) // P
        if rows % rep == 0:
            # Fold `rep` logical rows into each 128k-wide physical row so stores
            # are unmasked full-lane vst.  Pure reshape: no pad / slice passes.
            out = _launch(x2.reshape(rows // rep, rep * P), jnp.tile(pattern, rep))
            return out.reshape(rows, P)
        # Ragged row count: direct layout.  Stores are lane-masked, but HBM
        # traffic stays at the ideal 1 read + 1 write of x (no extra passes).
    return _launch(x2, pattern)


# ---------------- public wrapper ----------------

def add_bias(x, bias_param):
    """bias_param has shape (C, 1), mirroring nn.Parameter(bias.unsqueeze(1))."""
    C = bias_param.shape[0]
    bias_vec = bias_param.reshape(C).astype(x.dtype)

    if x.ndim == 2:
        assert x.shape[1] == C, "channel mismatch"
        return _lane_bias_add(x, bias_vec)

    if x.ndim == 4:
        N, Cx, H, W = x.shape
        assert Cx == C, "channel mismatch"
        S = H * W
        # Fold (C, H, W) into the lane axis with a per-lane bias of period C*S.
        out = _lane_bias_add(x.reshape(N, C * S), jnp.repeat(bias_vec, S))
        return out.reshape(N, C, H, W)

    raise ValueError("AddBias expects a 2-D or 4-D input")


if __name__ == "__main__":
    key = jax.random.PRNGKey(0)
    k_b, k1, k2, k3, k4, k5, k6, k7 = jax.random.split(key, 8)

    C = 4
    bias_vec = jax.random.normal(k_b, (C,), dtype=jnp.float32)
    bias_param = bias_vec[:, None]            # (C, 1), like nn.Parameter(bias.unsqueeze(1))

    # 4-D NCHW (primary shape): (2, 4, 16, 16) -> lane-folded (2, 1024)
    x4 = jax.random.normal(k1, (2, C, 16, 16), dtype=jnp.float32)
    out4 = jax.block_until_ready(add_bias(x4, bias_param))
    assert jnp.allclose(out4, x4 + bias_vec[None, :, None, None], atol=1e-6), "4D mismatch"

    # 2-D, small C, N divisible by rep -> lane-dense repack (no pad/slice passes)
    x2a = jax.random.normal(k2, (64, C), dtype=jnp.float32)
    out2a = jax.block_until_ready(add_bias(x2a, bias_param))
    assert jnp.allclose(out2a, x2a + bias_vec[None, :], atol=1e-6), "2D repack mismatch"

    # 2-D, small C, ragged N -> direct fallback (still 1R + 1W)
    x2b = jax.random.normal(k3, (2, C), dtype=jnp.float32)
    out2b = jax.block_until_ready(add_bias(x2b, bias_param))
    assert jnp.allclose(out2b, x2b + bias_vec[None, :], atol=1e-6), "2D ragged mismatch"

    # 2-D, wide C -> general tiled path (also exercises the >=2-block split)
    Cw = 256
    bias_w = jax.random.normal(k4, (Cw,), dtype=jnp.float32)
    xw = jax.random.normal(k5, (16, Cw), dtype=jnp.float32)
    outw = jax.block_until_ready(add_bias(xw, bias_w[:, None]))
    assert jnp.allclose(outw, xw + bias_w[None, :], atol=1e-6), "2D wide-C mismatch"

    # 4-D, tiny spatial dims -> C*H*W < 128 repack path
    x4s = jax.random.normal(k6, (2, C, 4, 4), dtype=jnp.float32)
    out4s = jax.block_until_ready(add_bias(x4s, bias_param))
    assert jnp.allclose(out4s, x4s + bias_vec[None, :, None, None], atol=1e-6), \
        "4D small-spatial mismatch"

    # bf16 input -> exercises the dtype-aware (16, 128) sublane granule
    xb = jax.random.normal(k7, (32, Cw), dtype=jnp.bfloat16)
    outb = jax.block_until_ready(add_bias(xb, bias_w[:, None]))
    ref_b = xb + bias_w.astype(jnp.bfloat16)[None, :]
    assert jnp.allclose(outb.astype(jnp.float32), ref_b.astype(jnp.float32), atol=1e-2), \
        "bf16 mismatch"

    print("KERNEL_OK")
</pallas_src>

<mosaic_0001>
module attributes {stable_mosaic.version = 11 : i64} {
  func.func @_add_kernel(%arg0: i32, %arg1: i32, %arg2: memref<2x512xf32, #tpu.memory_space<vmem>>, %arg3: memref<1x512xf32, #tpu.memory_space<vmem>>, %arg4: memref<2x512xf32, #tpu.memory_space<vmem>>) attributes {dimension_semantics = [#tpu.dimension_semantics<parallel>, #tpu.dimension_semantics<parallel>], iteration_bounds = array<i64: 1, 2>, scalar_prefetch = 0 : i64, scratch_operands = 0 : i64, tpu.core_type = #tpu.core_type<tc>, window_params = [{transform_indices = @transform_0, window_bounds = array<i64: 2, 512>}, {transform_indices = @transform_1, window_bounds = array<i64: 1, 512>}, {transform_indices = @transform_2, window_bounds = array<i64: 2, 512>}]} {
    %c0 = arith.constant 0 : index
    %c0_0 = arith.constant 0 : index
    %0 = vector.load %arg2[%c0, %c0_0] : memref<2x512xf32, #tpu.memory_space<vmem>>, vector<2x512xf32>
    %c0_1 = arith.constant 0 : index
    %c0_2 = arith.constant 0 : index
    %1 = vector.load %arg3[%c0_1, %c0_2] : memref<1x512xf32, #tpu.memory_space<vmem>>, vector<1x512xf32>
    %2 = vector.broadcast %1 : vector<1x512xf32> to vector<2x512xf32>
    %3 = arith.addf %0, %2 : vector<2x512xf32>
    %c0_3 = arith.constant 0 : index
    %c0_4 = arith.constant 0 : index
    %4 = vector.load %arg4[%c0_3, %c0_4] : memref<2x512xf32, #tpu.memory_space<vmem>>, vector<2x512xf32>
    tpu.vector_store %arg4[%c0_3, %c0_4], %3 {strides = array<i32>} : memref<2x512xf32, #tpu.memory_space<vmem>>, vector<2x512xf32>,
    return
  }
  func.func @transform_0(%arg0: i32, %arg1: i32) -> (i32, i32) {
    %c0_i32 = arith.constant 0 : i32
    return %arg0, %arg1 : i32, i32
  }
  func.func @transform_1(%arg0: i32, %arg1: i32) -> (i32, i32) {
    %c0_i32 = arith.constant 0 : i32
    %c0_i32_0 = arith.constant 0 : i32
    return %c0_i32, %arg1 : i32, i32
  }
  func.func @transform_2(%arg0: i32, %arg1: i32) -> (i32, i32) {
    %c0_i32 = arith.constant 0 : i32
    return %arg0, %arg1 : i32, i32
  }
}

</mosaic_0001>

<llo_original>
// kernel: tpu_custom_call.1
$region0: #{tpu_custom_call.1}
  #allocation0 [shape = 'u32[]', space=smem, size = 0x4, offset = 0x4, fixed_abs, tag = 'smem constant byte address 0x4 - core index']
  #allocation1 [shape = 'u32[144,128]{1,0:T(1,128)}', space=vmem, size = 0x12000, scoped, tag = 'internal scratch']
  %s0 = inlined_call_operand.hbm [shape: f32[2,1024], index: 0, kind: input, shape index: {}]
  %s1 = inlined_call_operand.hbm [shape: f32[1,1024], index: 1, kind: input, shape index: {}]
  %s2 = inlined_call_operand.hbm [shape: f32[2,1024], index: 2, kind: output, shape index: {}]
  %s3 = sld [smem:[#allocation0]]
  $region49: #{tpu_custom_call.1} parent=0
    _
  %s5 = ssub.s32 1, %s3
  %s6 = scalar_select 0, %s5, %s3
  $region1: #{tpu_custom_call.1} parent=0
    #allocation2 [shape = 'u8[8192]{0}', space=vmem, size = 0x2000, scoped, tag = 'input window, operand 0']
    #allocation3 [shape = 's32[2]{0}', space=sflag, size = 0x8, scoped, tag = 'scoped memory for tpu_custom_call.1']
    #allocation4 [shape = 's32[2]{0}', space=sflag, size = 0x8, scoped, tag = 'scoped memory for tpu_custom_call.1']
    #allocation5 [shape = 'u8[4096]{0}', space=vmem, size = 0x1000, scoped, tag = 'input window, operand 1']
    #allocation6 [shape = 's32[2]{0}', space=sflag, size = 0x8, scoped, tag = 'scoped memory for tpu_custom_call.1']
    #allocation7 [shape = 'u8[8192]{0}', space=vmem, size = 0x2000, scoped, tag = 'output window, operand 0']
    %7 = vsyncpa [#allocation3], 0
    %s8 = scalar_lea.sflag [#allocation3], 1
    %9 = vsyncpa %s8, 0
    %10 = vsyncpa [#allocation6], 0
    %s11 = scalar_lea.sflag [#allocation6], 1
    %12 = vsyncpa %s11, 0
    %13 = vsyncpa [#allocation4], 0
    %s14 = scalar_lea.sflag [#allocation4], 1
    %15 = vsyncpa %s14, 0
    loop: start=0, step=1, limit=4
    $region2: #{tpu_custom_call.1} parent=1 // loop_pre_header
      _
    $region3: #{tpu_custom_call.1} parent=1 // loop_header
      %s17 = sphi 0, %s21
      %p18 = scmp.ge.s32.totalorder %s17, 4
      %s24 = sphi 0, %s36
      %s25 = sphi 0, %s32
      %s26 = sphi 0, %s24
      %s27 = sphi 0, %s25
      %s28 = sphi 0, %s26
      %s29 = sphi 0, %s27
      %s41 = sphi 0, %s43
      %s44 = sphi 0, %s41
      %s45 = sphi 0, %s44
      %s61 = sphi 0, %s45
      %s67 = sphi 0, %s69
      %s70 = sphi 0, %s67
      %s71 = sphi 0, %s70
      %s87 = sphi 0, %s71
      %s95 = sphi 0, %s97
      %s98 = sphi 0, %s95
      %s99 = sphi 0, %s98
      %s115 = sphi 0, %s99
    $region4: #{tpu_custom_call.1} parent=1 // loop_header_branch
      %20 = sbr.rel (%p18) target = $region8
    $region5: #{tpu_custom_call.1} parent=1 // loop_body
      %s22 = ssub.s32 %s17, 1
      %s23 = ssub.s32 %s17, 2
      %s30 = sadd.s32 1, %s25
      %p31 = scmp.ge.s32.totalorder %s30, 2
      %s32 = scalar_select %p31, 0, %s30
      %s33 = sadd.s32 1, %s24
      %s34 = scalar_select %p31, %s33, %s24
      %p35 = scmp.ge.s32.totalorder %s34, 1
      %s36 = scalar_select %p35, 0, %s34
      %s37 = ssub.s32 %s24, %s36
      %s38 = ssub.s32 %s25, %s32
      %s39 = sor.u32 %s37, %s38
      %p40 = scmp.eq.s32.totalorder %s39, 0
      %s42 = sadd.s32 %s41, 1
      %s43 = scalar_select %p40, %s41, %s42
      %p46 = pneg %p40
      %p47 = scmp.eq.s32.totalorder %s17, 1
      %p48 = por %p46, %p47
      %p49 = scmp.ne.s32.totalorder %s41, %s44
      %p50 = scmp.eq.s32.totalorder %s17, 0
      %p51 = por %p49, %p50
      %p52 = scmp.ne.s32.totalorder %s41, %s44
      %p53 = scmp.eq.s32.totalorder %s22, 1
      %p54 = por %p52, %p53
      %p55 = scmp.ne.s32.totalorder %s44, %s45
      %p56 = scmp.eq.s32.totalorder %s22, 0
      %p57 = por %p55, %p56
      %p58 = scmp.ne.s32.totalorder %s44, %s45
      %p59 = scmp.eq.s32.totalorder %s23, 1
      %p60 = por %p58, %p59
      %p62 = scmp.ne.s32.totalorder %s45, %s61
      %p63 = scmp.eq.s32.totalorder %s23, 0
      %p64 = por %p62, %p63
      %s65 = ssub.s32 %s25, %s32
      %p66 = scmp.eq.s32.totalorder %s65, 0
      %s68 = sadd.s32 %s67, 1
      %s69 = scalar_select %p66, %s67, %s68
      %p72 = pneg %p66
      %p73 = scmp.eq.s32.totalorder %s17, 1
      %p74 = por %p72, %p73
      %p75 = scmp.ne.s32.totalorder %s67, %s70
      %p76 = scmp.eq.s32.totalorder %s17, 0
      %p77 = por %p75, %p76
      %p78 = scmp.ne.s32.totalorder %s67, %s70
      %p79 = scmp.eq.s32.totalorder %s22, 1
      %p80 = por %p78, %p79
      %p81 = scmp.ne.s32.totalorder %s70, %s71
      %p82 = scmp.eq.s32.totalorder %s22, 0
      %p83 = por %p81, %p82
      %p84 = scmp.ne.s32.totalorder %s70, %s71
      %p85 = scmp.eq.s32.totalorder %s23, 1
      %p86 = por %p84, %p85
      %p88 = scmp.ne.s32.totalorder %s71, %s87
      %p89 = scmp.eq.s32.totalorder %s23, 0
      %p90 = por %p88, %p89
      %s91 = ssub.s32 %s24, %s36
      %s92 = ssub.s32 %s25, %s32
      %s93 = sor.u32 %s91, %s92
      %p94 = scmp.eq.s32.totalorder %s93, 0
      %s96 = sadd.s32 %s95, 1
      %s97 = scalar_select %p94, %s95, %s96
      %p100 = pneg %p94
      %p101 = scmp.eq.s32.totalorder %s17, 1
      %p102 = por %p100, %p101
      %p103 = scmp.ne.s32.totalorder %s95, %s98
      %p104 = scmp.eq.s32.totalorder %s17, 0
      %p105 = por %p103, %p104
      %p106 = scmp.ne.s32.totalorder %s95, %s98
      %p107 = scmp.eq.s32.totalorder %s22, 1
      %p108 = por %p106, %p107
      %p109 = scmp.ne.s32.totalorder %s98, %s99
      %p110 = scmp.eq.s32.totalorder %s22, 0
      %p111 = por %p109, %p110
      %p112 = scmp.ne.s32.totalorder %s98, %s99
      %p113 = scmp.eq.s32.totalorder %s23, 1
      %p114 = por %p112, %p113
      %p116 = scmp.ne.s32.totalorder %s99, %s115
      %p117 = scmp.eq.s32.totalorder %s23, 0
      %p118 = por %p116, %p117
      %p119 = scmp.le.s32.totalorder 1, %s17
      %p120 = scmp.lt.s32.totalorder %s17, 3
      %p121 = pnand %p119, %p120
      %p122 = pneg %p121
      // Predicated region
      $region9: #{tpu_custom_call.1} parent=5 // pred_check
        _
      $region10: #{tpu_custom_call.1} parent=5 // pred_check_branch
        %124 = sbr.rel (%p121) target = $region12
      $region11: #{tpu_custom_call.1} parent=5 // pred_region
        %s125 = ssub.s32 %s17, 1
      $region12: #{tpu_custom_call.1} parent=5 // pred_fallthru
        _
      %p126 = scmp.lt.s32.totalorder %s17, 2
      // Predicated region
      $region13: #{tpu_custom_call.1} parent=5 // pred_check
        %p127 = pneg %p126
      $region14: #{tpu_custom_call.1} parent=5 // pred_check_branch
        %129 = sbr.rel (%p127) target = $region16
      $region15: #{tpu_custom_call.1} parent=5 // pred_region
        // Predicated region
        $region17: #{tpu_custom_call.1} parent=15 // pred_check
          %p130 = pneg %p51
        $region18: #{tpu_custom_call.1} parent=15 // pred_check_branch
          %132 = sbr.rel (%p130) target = $region20
        $region19: #{tpu_custom_call.1} parent=15 // pred_region
          %s133 = sand.u32 %s41, 1
          %s134 = scalar_lea.sflag [#allocation3], %s133
          %s135 = sand.u32 %s41, 1
          %s136 = smul.addr %s135, 8
          %s137 = scalar_lea.vmem [#allocation2], %s136
          %s138 = smul.u32 4, %s25
          %s140 = ssub.s32 128, 128
          %141 = vsyncadd %s134, %s140
          %s142 = smul.addr %s24, 8
          %s143 = sadd.s32 %s138, %s142
          %s144 = smul.addr %s143, 32
          %s145 = scalar_lea.hbm %s0, %s144
          %s147 = sshll.u32 %s137, 4
          %s148 = int_to_ptr.vmem [resolvable:$true] %s147
          %150 = dma.hbm_to_vmem [thread:$0]  %s145, 128, %s148, %s134
        $region20: #{tpu_custom_call.1} parent=15 // pred_fallthru
          _
        // Predicated region
        $region21: #{tpu_custom_call.1} parent=15 // pred_check
          %p151 = pneg %p77
        $region22: #{tpu_custom_call.1} parent=15 // pred_check_branch
          %153 = sbr.rel (%p151) target = $region24
        $region23: #{tpu_custom_call.1} parent=15 // pred_region
          %s154 = sand.u32 %s67, 1
          %s155 = scalar_lea.sflag [#allocation6], %s154
          %s156 = sand.u32 %s67, 1
          %s157 = smul.addr %s156, 4
          %s158 = scalar_lea.vmem [#allocation5], %s157
          %s159 = smul.u32 4, %s25
          %s161 = ssub.s32 64, 64
          %162 = vsyncadd %s155, %s161
          %s163 = smul.addr %s159, 16
          %s164 = scalar_lea.hbm %s1, %s163
          %s166 = sshll.u32 %s158, 4
          %s167 = int_to_ptr.vmem [resolvable:$true] %s166
          %169 = dma.hbm_to_vmem [thread:$0]  %s164, 64, %s167, %s155
        $region24: #{tpu_custom_call.1} parent=15 // pred_fallthru
          _
      $region16: #{tpu_custom_call.1} parent=5 // pred_fallthru
        _
      %p170 = scmp.le.s32.totalorder 1, %s17
      %p171 = scmp.lt.s32.totalorder %s17, 3
      %p172 = pnand %p170, %p171
      %p173 = pneg %p172
      // Predicated region
      $region25: #{tpu_custom_call.1} parent=5 // pred_check
        _
      $region26: #{tpu_custom_call.1} parent=5 // pred_check_branch
        %175 = sbr.rel (%p172) target = $region28
      $region27: #{tpu_custom_call.1} parent=5 // pred_region
        %s176 = ssub.s32 %s17, 1
        %s177 = sand.u32 %s44, 1
        %s178 = scalar_lea.sflag [#allocation3], %s177
        %s179 = sand.u32 %s44, 1
        %s180 = smul.addr %s179, 8
        %s181 = scalar_lea.vmem [#allocation2], %s180
        // Predicated region
        $region29: #{tpu_custom_call.1} parent=27 // pred_check
          %p182 = pneg %p57
        $region30: #{tpu_custom_call.1} parent=27 // pred_check_branch
          %184 = sbr.rel (%p182) target = $region32
        $region31: #{tpu_custom_call.1} parent=27 // pred_region
          %185 = dma.done %s178, 128
        $region32: #{tpu_custom_call.1} parent=27 // pred_fallthru
          _
        %s186 = sand.u32 %s70, 1
        %s187 = scalar_lea.sflag [#allocation6], %s186
        %s188 = sand.u32 %s70, 1
        %s189 = smul.addr %s188, 4
        %s190 = scalar_lea.vmem [#allocation5], %s189
        // Predicated region
        $region33: #{tpu_custom_call.1} parent=27 // pred_check
          %p191 = pneg %p83
        $region34: #{tpu_custom_call.1} parent=27 // pred_check_branch
          %193 = sbr.rel (%p191) target = $region36
        $region35: #{tpu_custom_call.1} parent=27 // pred_region
          %194 = dma.done %s187, 64
        $region36: #{tpu_custom_call.1} parent=27 // pred_fallthru
          _
        %s195 = sand.u32 %s44, 1
        %s196 = scalar_lea.sflag [#allocation3], %s195
        %s197 = sand.u32 %s44, 1
        %s198 = smul.addr %s197, 8
        %s199 = scalar_lea.vmem [#allocation2], %s198
        %p200 = pneg %p57
        %p201 = pneg %p54
        %s202 = sand.u32 %s70, 1
        %s203 = scalar_lea.sflag [#allocation6], %s202
        %s204 = sand.u32 %s70, 1
        %s205 = smul.addr %s204, 4
        %s206 = scalar_lea.vmem [#allocation5], %s205
        %p207 = pneg %p83
        %p208 = pneg %p80
        %p209 = pneg %p111
        %p210 = pneg %p108
        %s211 = sand.u32 %s98, 1
        %s212 = scalar_lea.sflag [#allocation4], %s211
        %s213 = sand.u32 %s98, 1
        %s214 = smul.addr %s213, 8
        %s215 = scalar_lea.vmem [#allocation7], %s214
        %s216 = smul.u32 4, %s27
        %s217 = smul.u32 4, %s27
        %s218 = smul.u32 4, %s27
        %v219 = vld [vmem:[%s181] sm:$0xff]
        %v220 = vld [vmem:[%s190] sm:$0xf]
        %v222 = vlaneseq
        %v223 = vshrl.u32 %v222, 7
        %v224 = vsub.s32 0, %v223
        %v225 = vrot.slane %v220, %v224
        %v226 = vlaneseq
        %v227 = vshrl.u32 %v226, 7
        %v228 = vsub.s32 1, %v227
        %v229 = vrot.slane %v220, %v228
        %v230 = vlaneseq
        %v231 = vshrl.u32 %v230, 7
        %v232 = vsub.s32 2, %v231
        %v233 = vrot.slane %v220, %v232
        %v234 = vlaneseq
        %v235 = vshrl.u32 %v234, 7
        %v236 = vsub.s32 3, %v235
        %v237 = vrot.slane %v220, %v236
        %v238 = vcombine.low %v225, %v229
        %v239 = vcombine.low %v233, %v237
        %v241 = vunpack.c.l.s4 1983009808
        %v242 = vunpack.c.0.s8 %v241
        %v243 = vlaneseq
        %v244 = vshrl.u32 %v243, 7
        %v245 = vsub.s32 %v242, %v244
        %v246 = vrot.slane %v238, %v245
        %v248 = vunpack.c.l.s4 1983009808
        %v249 = vunpack.c.0.s8 %v248
        %v250 = vlaneseq
        %v251 = vshrl.u32 %v250, 7
        %v252 = vsub.s32 %v249, %v251
        %v253 = vrot.slane %v239, %v252
        %v254 = vcombine.low %v246, %v253
        %v256 = vadd.f32 %v219, %v254
        %257 = vst [vmem:[%s215] sm:$0xff] %v256
        %s258 = sand.u32 %s98, 1
        %s259 = scalar_lea.sflag [#allocation4], %s258
        %s260 = sand.u32 %s98, 1
        %s261 = smul.addr %s260, 8
        %s262 = scalar_lea.vmem [#allocation7], %s261
        // Predicated region
        $region37: #{tpu_custom_call.1} parent=27 // pred_check
          %p263 = pneg %p108
        $region38: #{tpu_custom_call.1} parent=27 // pred_check_branch
          %265 = sbr.rel (%p263) target = $region40
        $region39: #{tpu_custom_call.1} parent=27 // pred_region
          %s266 = smul.u32 4, %s27
          %s268 = ssub.s32 128, 128
          %269 = vsyncadd %s259, %s268
          %s270 = smul.addr %s26, 8
          %s271 = sadd.s32 %s266, %s270
          %s272 = smul.addr %s271, 32
          %s273 = scalar_lea.hbm %s2, %s272
          %s275 = sshll.u32 %s262, 4
          %s276 = int_to_ptr.vmem [resolvable:$true] %s275
          %278 = dma.vmem_to_hbm [thread:$0]  %s276, 128, %s273, %s259
        $region40: #{tpu_custom_call.1} parent=27 // pred_fallthru
          _
      $region28: #{tpu_custom_call.1} parent=5 // pred_fallthru
        _
      %p279 = scmp.le.s32.totalorder 2, %s17
      // Predicated region
      $region41: #{tpu_custom_call.1} parent=5 // pred_check
        %p280 = pneg %p279
      $region42: #{tpu_custom_call.1} parent=5 // pred_check_branch
        %282 = sbr.rel (%p280) target = $region44
      $region43: #{tpu_custom_call.1} parent=5 // pred_region
        %s283 = ssub.s32 %s17, 2
        // Predicated region
        $region45: #{tpu_custom_call.1} parent=43 // pred_check
          %p284 = pneg %p114
        $region46: #{tpu_custom_call.1} parent=43 // pred_check_branch
          %286 = sbr.rel (%p284) target = $region48
        $region47: #{tpu_custom_call.1} parent=43 // pred_region
          %s287 = sand.u32 %s99, 1
          %s288 = scalar_lea.sflag [#allocation4], %s287
          %s289 = sand.u32 %s99, 1
          %s290 = smul.addr %s289, 8
          %s291 = scalar_lea.vmem [#allocation7], %s290
          %292 = dma.done %s288, 128
        $region48: #{tpu_custom_call.1} parent=43 // pred_fallthru
          _
      $region44: #{tpu_custom_call.1} parent=5 // pred_fallthru
        _
    $region6: #{tpu_custom_call.1} parent=1 // loop_footer
      %s21 = sadd.s32 1, %s17
    $region7: #{tpu_custom_call.1} parent=1 // loop_footer_branch
      %16 = sbr.rel target = $region3
    $region8: #{tpu_custom_call.1} parent=1 // loop_exit
      _
    %293 = vsyncpa [#allocation3], 1
    %s294 = scalar_lea.sflag [#allocation3], 1
    %295 = vsyncpa %s294, 1
    %296 = vsyncpa [#allocation6], 1
    %s297 = scalar_lea.sflag [#allocation6], 1
    %298 = vsyncpa %s297, 1
    %299 = vsyncpa [#allocation4], 1
    %s300 = scalar_lea.sflag [#allocation4], 1
    %301 = vsyncpa %s300, 1

</llo_original>
